<compile_context>
chip_gen: v7x
topology: tpu7x:2x2x1
jax: 0.10.0
libtpu: 0.0.40
codegen_flags: <defaults>
</compile_context>

<pallas_src>
import jax
import jax.numpy as jnp
from jax.experimental import pallas as pl
from jax.experimental.pallas import tpu as pltpu


def _xor_kernel_bool(a_ref, b_ref, o_ref):
    # torch.logical_xor semantics: nonzero -> True (NaN is nonzero), xor elementwise.
    o_ref[...] = jnp.logical_xor(a_ref[...] != 0, b_ref[...] != 0)


def _xor_kernel_i8(a_ref, b_ref, o_ref):
    # Fallback kernel (int8 0/1 output) if bool stores are rejected by Mosaic.
    o_ref[...] = jnp.logical_xor(a_ref[...] != 0, b_ref[...] != 0).astype(jnp.int8)


def _choose_tiling(n_main, *, max_lane=8192, target_block_elems=1 << 20):
    """Pick (lane, rows, row_tile) for a flat element count n_main (% 128 == 0)."""
    # Widest power-of-two lane (<= max_lane) that divides n_main while keeping
    # at least 8 rows so sublanes are filled (big arrays always get max_lane).
    lane = max_lane
    while lane > 128 and (n_main % lane != 0 or n_main // lane < 8):
        lane //= 2
    rows = n_main // lane

    # ~1M elems per block: 4 MiB per f32 input block; double-buffered
    # 2 inputs + 1 B/elem output ~= 18 MiB VMEM -> safe on v5e/v6e/v7x.
    tr = min(rows, max(32, target_block_elems // lane))
    tr = (tr // 32) * 32  # int8/bool output min sublane tile is 32
    if tr <= 0 or tr >= rows:
        tr = rows  # single full block (full-dim block shape is always legal)

    # Ensure >= 2 grid steps for non-trivial slabs so the "parallel" axis can
    # actually split across the two TensorCores on v7x megacore.
    if tr == rows and rows >= 64:
        half = (((rows + 1) // 2) + 31) // 32 * 32
        if 0 < half < rows:
            tr = half
    return lane, rows, tr


def _run_slab(a2, b2, rows, lane, tr):
    n_main = rows * lane
    cost = pl.CostEstimate(
        flops=3 * n_main,
        transcendentals=0,
        bytes_accessed=(a2.dtype.itemsize + b2.dtype.itemsize + 1) * n_main,
    )
    cparams = pltpu.CompilerParams(
        dimension_semantics=("parallel",),
        vmem_limit_bytes=48 << 20,
    )

    def call(kernel, out_dtype):
        return pl.pallas_call(
            kernel,
            out_shape=jax.ShapeDtypeStruct((rows, lane), out_dtype),
            grid=(pl.cdiv(rows, tr),),
            in_specs=[
                pl.BlockSpec((tr, lane), lambda i: (i, 0)),
                pl.BlockSpec((tr, lane), lambda i: (i, 0)),
            ],
            out_specs=pl.BlockSpec((tr, lane), lambda i: (i, 0)),
            compiler_params=cparams,
            cost_estimate=cost,
        )(a2, b2)

    try:
        # Preferred: bool output straight from the kernel (no extra HBM pass).
        return jax.block_until_ready(call(_xor_kernel_bool, jnp.bool_))
    except Exception:
        # Fallback if this Mosaic/JAX build rejects bool stores: int8 + astype.
        return call(_xor_kernel_i8, jnp.int8).astype(jnp.bool_)


def logical_xor_pallas(a, b, *, min_pallas_elems=65536):
    """torch.logical_xor(a, b): elementwise (a != 0) XOR (b != 0), bool output."""
    assert a.shape == b.shape, "elementwise op requires equal shapes here"
    orig_shape = a.shape
    n = a.size
    if n == 0:
        return jnp.zeros(orig_shape, jnp.bool_)

    n_main = (n // 128) * 128
    if n < min_pallas_elems or n_main == 0:
        # Tiny input: fixed launch/DMA overhead dwarfs the work -> plain jnp.
        return jnp.logical_xor(a != 0, b != 0)

    a_flat = a.reshape(-1)
    b_flat = b.reshape(-1)
    lane, rows, tr = _choose_tiling(n_main)

    if n_main == n:
        a2 = a_flat.reshape(rows, lane)  # copy-free reshape (common path)
        b2 = b_flat.reshape(rows, lane)
    else:
        a2 = a_flat[:n_main].reshape(rows, lane)
        b2 = b_flat[:n_main].reshape(rows, lane)

    out_flat = _run_slab(a2, b2, rows, lane, tr).reshape(-1)

    if n_main != n:
        # <128-element tail handled in plain jnp (no full-array pad/slice passes).
        tail = jnp.logical_xor(a_flat[n_main:] != 0, b_flat[n_main:] != 0)
        out_flat = jnp.concatenate([out_flat, tail])

    return out_flat.reshape(orig_shape)


if __name__ == "__main__":
    key = jax.random.PRNGKey(0)

    def make_pair(k, shape, dtype=jnp.float32):
        k1, k2, k3, k4 = jax.random.split(k, 4)
        if jnp.issubdtype(dtype, jnp.floating):
            x0 = jnp.where(jax.random.uniform(k1, shape) > 0.5,
                           jax.random.normal(k3, shape), 0.0).astype(dtype)
            x1 = jnp.where(jax.random.uniform(k2, shape) > 0.5,
                           jax.random.normal(k4, shape), 0.0).astype(dtype)
        else:
            x0 = jax.random.randint(k1, shape, -2, 3).astype(dtype)
            x1 = jax.random.randint(k2, shape, -2, 3).astype(dtype)
        return x0, x1

    k_a, k_b, k_c = jax.random.split(key, 3)

    # 1) Demo shape from the PyTorch example (NCHW 2x4x16x16); force the Pallas path.
    x0, x1 = make_pair(k_a, (2, 4, 16, 16))
    y = jax.block_until_ready(logical_xor_pallas(x0, x1, min_pallas_elems=0))
    ref = jnp.logical_xor(x0 != 0, x1 != 0)
    assert y.dtype == jnp.bool_
    assert y.shape == x0.shape
    assert bool(jnp.all(y == ref))

    # 2) Ragged element count (not a multiple of 128) exercises the jnp tail path.
    x0, x1 = make_pair(k_b, (3, 5, 7, 11), jnp.int32)
    y = jax.block_until_ready(logical_xor_pallas(x0, x1, min_pallas_elems=0))
    assert bool(jnp.all(y == jnp.logical_xor(x0 != 0, x1 != 0)))

    # 3) Larger slab exercises the wide-lane, multi-step "parallel" grid.
    x0, x1 = make_pair(k_c, (8, 16, 128, 128))
    y = jax.block_until_ready(logical_xor_pallas(x0, x1))
    assert bool(jnp.all(y == jnp.logical_xor(x0 != 0, x1 != 0)))

    print("KERNEL_OK")
</pallas_src>

<mosaic_0001>
module attributes {stable_mosaic.version = 11 : i64} {
  func.func @_xor_kernel_bool(%arg0: i32, %arg1: memref<8x256xf32, #tpu.memory_space<vmem>>, %arg2: memref<8x256xf32, #tpu.memory_space<vmem>>, %arg3: memref<8x256xi32, #tpu.memory_space<vmem>>) attributes {dimension_semantics = [#tpu.dimension_semantics<parallel>], iteration_bounds = array<i64: 1>, scalar_prefetch = 0 : i64, scratch_operands = 0 : i64, tpu.core_type = #tpu.core_type<tc>, window_params = [{transform_indices = @transform_0, window_bounds = array<i64: 8, 256>}, {transform_indices = @transform_1, window_bounds = array<i64: 8, 256>}, {transform_indices = @transform_2, window_bounds = array<i64: 8, 256>}]} {
    %c0 = arith.constant 0 : index
    %c0_0 = arith.constant 0 : index
    %0 = vector.load %arg1[%c0, %c0_0] : memref<8x256xf32, #tpu.memory_space<vmem>>, vector<8x256xf32>
    %cst = arith.constant 0.000000e+00 : f32
    %1 = vector.broadcast %cst : f32 to vector<8x256xf32>
    %2 = arith.cmpf one, %0, %1 : vector<8x256xf32>
    %c0_1 = arith.constant 0 : index
    %c0_2 = arith.constant 0 : index
    %3 = vector.load %arg2[%c0_1, %c0_2] : memref<8x256xf32, #tpu.memory_space<vmem>>, vector<8x256xf32>
    %cst_3 = arith.constant 0.000000e+00 : f32
    %4 = vector.broadcast %cst_3 : f32 to vector<8x256xf32>
    %5 = arith.cmpf one, %3, %4 : vector<8x256xf32>
    %6 = arith.xori %2, %5 : vector<8x256xi1>
    %c0_4 = arith.constant 0 : index
    %c0_5 = arith.constant 0 : index
    %7 = vector.load %arg3[%c0_4, %c0_5] : memref<8x256xi32, #tpu.memory_space<vmem>>, vector<8x256xi32>
    %8 = arith.extui %6 : vector<8x256xi1> to vector<8x256xi32>
    %cst_6 = arith.constant dense<0> : vector<8x256xi32>
    %9 = arith.cmpi ne, %7, %cst_6 : vector<8x256xi32>
    tpu.vector_store %arg3[%c0_4, %c0_5], %8 {strides = array<i32>} : memref<8x256xi32, #tpu.memory_space<vmem>>, vector<8x256xi32>,
    return
  }
  func.func @transform_0(%arg0: i32) -> (i32, i32) {
    %c0_i32 = arith.constant 0 : i32
    %c0_i32_0 = arith.constant 0 : i32
    return %arg0, %c0_i32 : i32, i32
  }
  func.func @transform_1(%arg0: i32) -> (i32, i32) {
    %c0_i32 = arith.constant 0 : i32
    %c0_i32_0 = arith.constant 0 : i32
    return %arg0, %c0_i32 : i32, i32
  }
  func.func @transform_2(%arg0: i32) -> (i32, i32) {
    %c0_i32 = arith.constant 0 : i32
    %c0_i32_0 = arith.constant 0 : i32
    return %arg0, %c0_i32 : i32, i32
  }
}

module attributes {stable_mosaic.version = 11 : i64} {
  func.func @_xor_kernel_i8(%arg0: i32, %arg1: memref<8x256xf32, #tpu.memory_space<vmem>>, %arg2: memref<8x256xf32, #tpu.memory_space<vmem>>, %arg3: memref<8x256xi8, #tpu.memory_space<vmem>>) attributes {dimension_semantics = [#tpu.dimension_semantics<parallel>], iteration_bounds = array<i64: 1>, scalar_prefetch = 0 : i64, scratch_operands = 0 : i64, tpu.core_type = #tpu.core_type<tc>, window_params = [{transform_indices = @transform_0, window_bounds = array<i64: 8, 256>}, {transform_indices = @transform_1, window_bounds = array<i64: 8, 256>}, {transform_indices = @transform_2, window_bounds = array<i64: 8, 256>}]} {
    %c0 = arith.constant 0 : index
    %c0_0 = arith.constant 0 : index
    %0 = vector.load %arg1[%c0, %c0_0] : memref<8x256xf32, #tpu.memory_space<vmem>>, vector<8x256xf32>
    %cst = arith.constant 0.000000e+00 : f32
    %1 = vector.broadcast %cst : f32 to vector<8x256xf32>
    %2 = arith.cmpf one, %0, %1 : vector<8x256xf32>
    %c0_1 = arith.constant 0 : index
    %c0_2 = arith.constant 0 : index
    %3 = vector.load %arg2[%c0_1, %c0_2] : memref<8x256xf32, #tpu.memory_space<vmem>>, vector<8x256xf32>
    %cst_3 = arith.constant 0.000000e+00 : f32
    %4 = vector.broadcast %cst_3 : f32 to vector<8x256xf32>
    %5 = arith.cmpf one, %3, %4 : vector<8x256xf32>
    %6 = arith.xori %2, %5 : vector<8x256xi1>
    %7 = arith.extui %6 : vector<8x256xi1> to vector<8x256xi8>
    %c0_4 = arith.constant 0 : index
    %c0_5 = arith.constant 0 : index
    %8 = vector.load %arg3[%c0_4, %c0_5] : memref<8x256xi8, #tpu.memory_space<vmem>>, vector<8x256xi8>
    tpu.vector_store %arg3[%c0_4, %c0_5], %7 {strides = array<i32>} : memref<8x256xi8, #tpu.memory_space<vmem>>, vector<8x256xi8>,
    return
  }
  func.func @transform_0(%arg0: i32) -> (i32, i32) {
    %c0_i32 = arith.constant 0 : i32
    %c0_i32_0 = arith.constant 0 : i32
    return %arg0, %c0_i32 : i32, i32
  }
  func.func @transform_1(%arg0: i32) -> (i32, i32) {
    %c0_i32 = arith.constant 0 : i32
    %c0_i32_0 = arith.constant 0 : i32
    return %arg0, %c0_i32 : i32, i32
  }
  func.func @transform_2(%arg0: i32) -> (i32, i32) {
    %c0_i32 = arith.constant 0 : i32
    %c0_i32_0 = arith.constant 0 : i32
    return %arg0, %c0_i32 : i32, i32
  }
}

</mosaic_0001>

<llo_original>
// kernel: tpu_custom_call.1
$region0: #{tpu_custom_call.1}
  #allocation0 [shape = 'u32[]', space=smem, size = 0x4, offset = 0x4, fixed_abs, tag = 'smem constant byte address 0x4 - core index']
  #allocation1 [shape = 'u32[144,128]{1,0:T(1,128)}', space=vmem, size = 0x12000, scoped, tag = 'internal scratch']
  %s0 = inlined_call_operand.hbm [shape: f32[8,256], index: 0, kind: input, shape index: {}]
  %s1 = inlined_call_operand.hbm [shape: f32[8,256], index: 1, kind: input, shape index: {}]
  %s2 = inlined_call_operand.vmem [shape: s32[8,256], index: 2, kind: output, shape index: {}]
  %s3 = sld [smem:[#allocation0]]
  $region26: #{tpu_custom_call.1} parent=0
    _
  %s5 = ssub.s32 1, %s3
  %s6 = scalar_select 0, %s5, %s3
  $region1: #{tpu_custom_call.1} parent=0
    #allocation2 [shape = 'u8[8192]{0}', space=vmem, size = 0x2000, scoped, tag = 'input window, operand 0, single buffered']
    #allocation3 [shape = 's32[1]{0}', space=sflag, size = 0x4, scoped, tag = 'scoped memory for tpu_custom_call.1']
    #allocation4 [shape = 'u8[8192]{0}', space=vmem, size = 0x2000, scoped, tag = 'input window, operand 1, single buffered']
    #allocation5 [shape = 's32[1]{0}', space=sflag, size = 0x4, scoped, tag = 'scoped memory for tpu_custom_call.1']
    %7 = vsyncpa [#allocation3], 0
    %8 = vsyncpa [#allocation5], 0
    // Predicated region
    $region2: #{tpu_custom_call.1} parent=1 // pred_check
      _
    $region3: #{tpu_custom_call.1} parent=1 // pred_check_branch
      %10 = sbr.rel (0) target = $region5
    $region4: #{tpu_custom_call.1} parent=1 // pred_region
      %s12 = ssub.s32 256, 256
      %13 = vsyncadd [#allocation3], %s12
      %s15 = sshll.u32 [#allocation2], 4
      %s16 = int_to_ptr.vmem [resolvable:$true] %s15
      %18 = dma.hbm_to_vmem [thread:$0]  %s0, 256, %s16, [#allocation3]
    $region5: #{tpu_custom_call.1} parent=1 // pred_fallthru
      _
    // Predicated region
    $region6: #{tpu_custom_call.1} parent=1 // pred_check
      _
    $region7: #{tpu_custom_call.1} parent=1 // pred_check_branch
      %20 = sbr.rel (0) target = $region9
    $region8: #{tpu_custom_call.1} parent=1 // pred_region
      %s22 = ssub.s32 256, 256
      %23 = vsyncadd [#allocation5], %s22
      %s25 = sshll.u32 [#allocation4], 4
      %s26 = int_to_ptr.vmem [resolvable:$true] %s25
      %28 = dma.hbm_to_vmem [thread:$0]  %s1, 256, %s26, [#allocation5]
    $region9: #{tpu_custom_call.1} parent=1 // pred_fallthru
      _
    // Predicated region
    $region10: #{tpu_custom_call.1} parent=1 // pred_check
      _
    $region11: #{tpu_custom_call.1} parent=1 // pred_check_branch
      %30 = sbr.rel (0) target = $region13
    $region12: #{tpu_custom_call.1} parent=1 // pred_region
      %31 = dma.done [#allocation3], 256
    $region13: #{tpu_custom_call.1} parent=1 // pred_fallthru
      _
    // Predicated region
    $region14: #{tpu_custom_call.1} parent=1 // pred_check
      _
    $region15: #{tpu_custom_call.1} parent=1 // pred_check_branch
      %33 = sbr.rel (0) target = $region17
    $region16: #{tpu_custom_call.1} parent=1 // pred_region
      %34 = dma.done [#allocation5], 256
    $region17: #{tpu_custom_call.1} parent=1 // pred_fallthru
      _
    %v35 = vld [vmem:[#allocation2] sm:$0xff]
    %v36 = vld [vmem:[#allocation2 + $0x8] sm:$0xff]
    %vm37 = vcmp.ne.f32.partialorder %v35, 0.0
    %vm38 = vcmp.ne.f32.partialorder %v36, 0.0
    %v39 = vld [vmem:[#allocation4] sm:$0xff]
    %v40 = vld [vmem:[#allocation4 + $0x8] sm:$0xff]
    %vm41 = vcmp.ne.f32.partialorder %v39, 0.0
    %vm42 = vcmp.ne.f32.partialorder %v40, 0.0
    %vm43 = vmxor %vm37, %vm41
    %vm44 = vmxor %vm38, %vm42
    %v45 = vsel %vm43, 1, 0
    %v46 = vsel %vm44, 1, 0
    %47 = vst [vmem:[%s2] sm:$0xff] %v45
    %48 = vst [vmem:[%s2 + $0x8] sm:$0xff] %v46
    // Predicated region
    $region18: #{tpu_custom_call.1} parent=1 // pred_check
      _
    $region19: #{tpu_custom_call.1} parent=1 // pred_check_branch
      %50 = sbr.rel (0) target = $region21
    $region20: #{tpu_custom_call.1} parent=1 // pred_region
      _
    $region21: #{tpu_custom_call.1} parent=1 // pred_fallthru
      _
    // Predicated region
    $region22: #{tpu_custom_call.1} parent=1 // pred_check
      _
    $region23: #{tpu_custom_call.1} parent=1 // pred_check_branch
      %52 = sbr.rel (0) target = $region25
    $region24: #{tpu_custom_call.1} parent=1 // pred_region
      _
    $region25: #{tpu_custom_call.1} parent=1 // pred_fallthru
      _
    %53 = vsyncpa [#allocation3], 1
    %54 = vsyncpa [#allocation5], 1

// kernel: tpu_custom_call.1
$region0: #{tpu_custom_call.1}
  #allocation0 [shape = 'u32[]', space=smem, size = 0x4, offset = 0x4, fixed_abs, tag = 'smem constant byte address 0x4 - core index']
  #allocation1 [shape = 'u32[144,128]{1,0:T(1,128)}', space=vmem, size = 0x12000, scoped, tag = 'internal scratch']
  %s0 = inlined_call_operand.hbm [shape: f32[8,256], index: 0, kind: input, shape index: {}]
  %s1 = inlined_call_operand.hbm [shape: f32[8,256], index: 1, kind: input, shape index: {}]
  %s2 = inlined_call_operand.hbm [shape: s8[8,256], index: 2, kind: output, shape index: {}]
  %s3 = sld [smem:[#allocation0]]
  $region26: #{tpu_custom_call.1} parent=0
    _
  %s5 = ssub.s32 1, %s3
  %s6 = scalar_select 0, %s5, %s3
  $region1: #{tpu_custom_call.1} parent=0
    #allocation2 [shape = 'u8[8192]{0}', space=vmem, size = 0x2000, scoped, tag = 'input window, operand 0, single buffered']
    #allocation3 [shape = 's32[1]{0}', space=sflag, size = 0x4, scoped, tag = 'scoped memory for tpu_custom_call.1']
    #allocation4 [shape = 's32[1]{0}', space=sflag, size = 0x4, scoped, tag = 'scoped memory for tpu_custom_call.1']
    #allocation5 [shape = 'u8[8192]{0}', space=vmem, size = 0x2000, scoped, tag = 'input window, operand 1, single buffered']
    #allocation6 [shape = 's32[1]{0}', space=sflag, size = 0x4, scoped, tag = 'scoped memory for tpu_custom_call.1']
    #allocation7 [shape = 'u8[2048]{0}', space=vmem, size = 0x800, scoped, tag = 'output window, operand 0, single buffered']
    %7 = vsyncpa [#allocation3], 0
    %8 = vsyncpa [#allocation6], 0
    %9 = vsyncpa [#allocation4], 0
    // Predicated region
    $region2: #{tpu_custom_call.1} parent=1 // pred_check
      _
    $region3: #{tpu_custom_call.1} parent=1 // pred_check_branch
      %11 = sbr.rel (0) target = $region5
    $region4: #{tpu_custom_call.1} parent=1 // pred_region
      %s13 = ssub.s32 256, 256
      %14 = vsyncadd [#allocation3], %s13
      %s16 = sshll.u32 [#allocation2], 4
      %s17 = int_to_ptr.vmem [resolvable:$true] %s16
      %19 = dma.hbm_to_vmem [thread:$0]  %s0, 256, %s17, [#allocation3]
    $region5: #{tpu_custom_call.1} parent=1 // pred_fallthru
      _
    // Predicated region
    $region6: #{tpu_custom_call.1} parent=1 // pred_check
      _
    $region7: #{tpu_custom_call.1} parent=1 // pred_check_branch
      %21 = sbr.rel (0) target = $region9
    $region8: #{tpu_custom_call.1} parent=1 // pred_region
      %s23 = ssub.s32 256, 256
      %24 = vsyncadd [#allocation6], %s23
      %s26 = sshll.u32 [#allocation5], 4
      %s27 = int_to_ptr.vmem [resolvable:$true] %s26
      %29 = dma.hbm_to_vmem [thread:$0]  %s1, 256, %s27, [#allocation6]
    $region9: #{tpu_custom_call.1} parent=1 // pred_fallthru
      _
    // Predicated region
    $region10: #{tpu_custom_call.1} parent=1 // pred_check
      _
    $region11: #{tpu_custom_call.1} parent=1 // pred_check_branch
      %31 = sbr.rel (0) target = $region13
    $region12: #{tpu_custom_call.1} parent=1 // pred_region
      %32 = dma.done [#allocation3], 256
    $region13: #{tpu_custom_call.1} parent=1 // pred_fallthru
      _
    // Predicated region
    $region14: #{tpu_custom_call.1} parent=1 // pred_check
      _
    $region15: #{tpu_custom_call.1} parent=1 // pred_check_branch
      %34 = sbr.rel (0) target = $region17
    $region16: #{tpu_custom_call.1} parent=1 // pred_region
      %35 = dma.done [#allocation6], 256
    $region17: #{tpu_custom_call.1} parent=1 // pred_fallthru
      _
    %v38 = vld [vmem:[#allocation2] sm:$0xff]
    %v39 = vld [vmem:[#allocation2 + $0x8] sm:$0xff]
    %vm40 = vcmp.ne.f32.partialorder %v38, 0.0
    %vm41 = vcmp.ne.f32.partialorder %v39, 0.0
    %v42 = vld [vmem:[#allocation5] sm:$0xff]
    %v43 = vld [vmem:[#allocation5 + $0x8] sm:$0xff]
    %vm44 = vcmp.ne.f32.partialorder %v42, 0.0
    %vm45 = vcmp.ne.f32.partialorder %v43, 0.0
    %vm46 = vmxor %vm40, %vm44
    %vm47 = vmxor %vm41, %vm45
    %vm48 = vmpackc.low %vm46, %vm46
    %vm49 = vmpackc.even %vm48, %vm48
    %vm50 = vmpackc.low %vm47, %vm47
    %vm51 = vmpackc.even %vm50, %vm50
    %v52 = vsel %vm49, 16843009, 0
    %v53 = vsel %vm51, 16843009, 0
    %v54 = vunpack.c.0.s8 %v52
    %v55 = vunpack.c.0.s8 %v53
    %v56 = vpack.c.b16 %v55, %v54
    %v57 = vpack.c.b8 %v56, %v56
    %58 = vst [vmem:[#allocation7] sm:$0xf] %v57
    // Predicated region
    $region18: #{tpu_custom_call.1} parent=1 // pred_check
      _
    $region19: #{tpu_custom_call.1} parent=1 // pred_check_branch
      %60 = sbr.rel (0) target = $region21
    $region20: #{tpu_custom_call.1} parent=1 // pred_region
      %s62 = ssub.s32 64, 64
      %63 = vsyncadd [#allocation4], %s62
      %s65 = sshll.u32 [#allocation7], 4
      %s66 = int_to_ptr.vmem [resolvable:$true] %s65
      %68 = dma.vmem_to_hbm [thread:$0]  %s66, 64, %s2, [#allocation4]
    $region21: #{tpu_custom_call.1} parent=1 // pred_fallthru
      _
    // Predicated region
    $region22: #{tpu_custom_call.1} parent=1 // pred_check
      _
    $region23: #{tpu_custom_call.1} parent=1 // pred_check_branch
      %70 = sbr.rel (0) target = $region25
    $region24: #{tpu_custom_call.1} parent=1 // pred_region
      %71 = dma.done [#allocation4], 64
    $region25: #{tpu_custom_call.1} parent=1 // pred_fallthru
      _
    %72 = vsyncpa [#allocation3], 1
    %73 = vsyncpa [#allocation6], 1
    %74 = vsyncpa [#allocation4], 1

</llo_original>
